<compile_context>
chip_gen: v6e
topology: v6e:2x2x1
jax: 0.10.0
libtpu: 0.0.40
codegen_flags: <defaults>
</compile_context>

<pallas_src>
import functools

import jax
import jax.numpy as jnp
from jax.experimental import pallas as pl
from jax.experimental.pallas import tpu as pltpu


def _round_up(n, m):
    return ((n + m - 1) // m) * m


def _vmem_budget():
    """(per_input_buffer_bytes, vmem_limit_bytes), gated on chip VMEM capacity."""
    per_buf, limit = 12 * 2**20, 48 * 2**20          # v7x-safe: 64 MiB VMEM per TC
    try:
        cap = pltpu.get_tpu_info().vmem_capacity_bytes
        if cap >= 100 * 2**20:                       # v5e / v6e: 128 MiB VMEM
            per_buf, limit = 32 * 2**20, min(96 * 2**20, cap - 16 * 2**20)
    except Exception:
        pass
    return per_buf, limit


def _choose_block_rows(batch, feat, itemsize, per_buf_budget):
    # Byte-accurate x-tile footprint: lanes pad to 128 in VMEM.
    row_bytes = _round_up(feat, 128) * itemsize
    max_rows = max(8, per_buf_budget // max(row_bytes, 1))
    tb = min(max_rows, _round_up(batch, 8))
    if tb >= 1024:
        tb = (tb // 1024) * 1024          # output lane dim TB//8 becomes a 128-multiple
    else:
        base = 16 if itemsize < 4 else 8  # sublane packing for bf16/fp16 inputs
        tb = max(base, (tb // base) * base)
    return tb


def _next_reward_kernel(x_ref, w_ref, b_ref, o_ref):
    # x_ref: (TB, F) VMEM tile; w_ref: (1, F) VMEM (resident); b_ref: (1,) f32 SMEM;
    # o_ref: (8, TB//8) lane-dense output tile.
    x = x_ref[...].astype(jnp.float32)                 # (TB, F)
    w = w_ref[...].astype(jnp.float32)                 # (1, F), broadcasts over rows
    # Linear(F, 1): VPU multiply + cross-lane reduce (no MXU push/pop for a 1-column matmul).
    row = jnp.sum(x * w, axis=-1) + b_ref[0]           # (TB,)
    out = jnp.tanh(row)                                # EUP transcendental (free slot)
    # One sublane->lane relayout per tile (XLU is idle) so the store is an unmasked,
    # lane-dense vst instead of a masked (TB, 1) partial store.
    o_ref[...] = out.reshape(o_ref.shape).astype(o_ref.dtype)


@functools.partial(jax.jit, static_argnames=("block_rows",))
def next_reward_predictor(x, weight, bias, *, block_rows=None):
    """tanh(x @ W^T + b).  x: (B, F); weight: (1, F); bias: (1,)  ->  (B, 1)."""
    B, F = x.shape
    per_buf, vmem_limit = _vmem_budget()
    tb = block_rows if block_rows is not None else _choose_block_rows(
        B, F, x.dtype.itemsize, per_buf)
    assert tb % 8 == 0, "block_rows must be a multiple of 8"
    n_tiles = pl.cdiv(B, tb)

    out = pl.pallas_call(
        _next_reward_kernel,
        out_shape=jax.ShapeDtypeStruct((n_tiles * 8, tb // 8), x.dtype),
        grid=(n_tiles,),
        in_specs=[
            pl.BlockSpec((tb, F), lambda i: (i, 0)),             # x: tiled over batch (double-buffered)
            pl.BlockSpec((1, F), lambda i: (0, 0)),              # weight: constant block -> resident
            pl.BlockSpec(memory_space=pltpu.MemorySpace.SMEM),   # bias: f32 scalar in SMEM
        ],
        out_specs=pl.BlockSpec((8, tb // 8), lambda i: (i, 0)),
        compiler_params=pltpu.CompilerParams(
            # TODO(synk): on v7x, switch this axis to pltpu.CORE_PARALLEL once dual-TC
            # DMA issue is verified in a trace; "parallel" is a safe no-op on v5e/v6e.
            dimension_semantics=("parallel",),
            vmem_limit_bytes=vmem_limit,
        ),
        cost_estimate=pl.CostEstimate(
            flops=2 * B * F,
            transcendentals=B,
            bytes_accessed=x.dtype.itemsize * (B * F + F + n_tiles * tb) + 4,
        ),
    )(x, weight, bias.astype(jnp.float32))

    # Row r of batch-tile i sits at slab position (8*i + r // (tb//8), r % (tb//8)); a
    # row-major flatten restores batch order.  Rows >= B (ragged last tile) are dropped.
    return out.reshape(-1)[:B].reshape(B, 1)


if __name__ == "__main__":
    key = jax.random.PRNGKey(0)
    k_x, k_w, k_b, k_x2 = jax.random.split(key, 4)

    in_size = 32
    batch = 8

    # Mimic PyTorch Linear's uniform(-1/sqrt(F), 1/sqrt(F)) init, deterministically.
    bound = 1.0 / (in_size ** 0.5)
    weight = jax.random.uniform(k_w, (1, in_size), jnp.float32, -bound, bound)
    bias = jax.random.uniform(k_b, (1,), jnp.float32, -bound, bound)

    x = jax.random.normal(k_x, (batch, in_size), jnp.float32)
    out = next_reward_predictor(x, weight, bias)
    jax.block_until_ready(out)

    ref = jnp.tanh(x @ weight.T + bias)
    assert out.shape == (batch, 1)
    assert jnp.allclose(out, ref, atol=1e-5, rtol=1e-5)

    # Exercise the no-pad / ragged-last-block, multi-tile path (B not a multiple of TB).
    batch2 = 200
    x2 = jax.random.normal(k_x2, (batch2, in_size), jnp.float32)
    out2 = next_reward_predictor(x2, weight, bias, block_rows=64)
    jax.block_until_ready(out2)
    ref2 = jnp.tanh(x2 @ weight.T + bias)
    assert out2.shape == (batch2, 1)
    assert jnp.allclose(out2, ref2, atol=1e-5, rtol=1e-5)

    print("KERNEL_OK")
</pallas_src>

<mosaic_0001>
module attributes {stable_mosaic.version = 11 : i64} {
  func.func @_next_reward_kernel(%arg0: i32, %arg1: memref<8x32xf32, #tpu.memory_space<vmem>>, %arg2: memref<1x32xf32, #tpu.memory_space<vmem>>, %arg3: memref<1xf32, #tpu.memory_space<smem>>, %arg4: memref<8x1xf32, #tpu.memory_space<vmem>>) attributes {dimension_semantics = [#tpu.dimension_semantics<parallel>], iteration_bounds = array<i64: 1>, scalar_prefetch = 0 : i64, scratch_operands = 0 : i64, tpu.core_type = #tpu.core_type<tc>, window_params = [{transform_indices = @transform_0, window_bounds = array<i64: 8, 32>}, {pipeline_mode = #tpu.pipeline_mode<synchronous>, transform_indices = @transform_1, window_bounds = array<i64: 1, 32>}, {transform_indices = @transform_2, window_bounds = array<i64: 1>}, {transform_indices = @transform_3, window_bounds = array<i64: 8, 1>}]} {
    %c0 = arith.constant 0 : index
    %c0_0 = arith.constant 0 : index
    %0 = vector.load %arg1[%c0, %c0_0] : memref<8x32xf32, #tpu.memory_space<vmem>>, vector<8x32xf32>
    %c0_1 = arith.constant 0 : index
    %c0_2 = arith.constant 0 : index
    %1 = vector.load %arg2[%c0_1, %c0_2] : memref<1x32xf32, #tpu.memory_space<vmem>>, vector<1x32xf32>
    %2 = vector.broadcast %1 : vector<1x32xf32> to vector<8x32xf32>
    %3 = arith.mulf %0, %2 : vector<8x32xf32>
    %cst = arith.constant dense<0.000000e+00> : vector<8xf32>
    %4 = vector.multi_reduction <add>, %3, %cst [1] : vector<8x32xf32> to vector<8xf32>
    %c0_3 = arith.constant 0 : index
    %5 = memref.load %arg3[%c0_3] : memref<1xf32, #tpu.memory_space<smem>>
    %6 = vector.broadcast %5 : f32 to vector<8xf32>
    %7 = arith.addf %4, %6 : vector<8xf32>
    %8 = math.tanh %7 : vector<8xf32>
    %9 = vector.shape_cast %8 : vector<8xf32> to vector<8x1xf32>
    %c0_4 = arith.constant 0 : index
    %c0_5 = arith.constant 0 : index
    %10 = vector.load %arg4[%c0_4, %c0_5] : memref<8x1xf32, #tpu.memory_space<vmem>>, vector<8x1xf32>
    tpu.vector_store %arg4[%c0_4, %c0_5], %9 {strides = array<i32>} : memref<8x1xf32, #tpu.memory_space<vmem>>, vector<8x1xf32>,
    return
  }
  func.func @transform_0(%arg0: i32) -> (i32, i32) {
    %c0_i32 = arith.constant 0 : i32
    %c0_i32_0 = arith.constant 0 : i32
    return %arg0, %c0_i32 : i32, i32
  }
  func.func @transform_1(%arg0: i32) -> (i32, i32) {
    %c0_i32 = arith.constant 0 : i32
    %c0_i32_0 = arith.constant 0 : i32
    %c0_i32_1 = arith.constant 0 : i32
    return %c0_i32, %c0_i32_0 : i32, i32
  }
  func.func @transform_2(%arg0: i32) -> i32 {
    %c0_i32 = arith.constant 0 : i32
    %c0_i32_0 = arith.constant 0 : i32
    return %c0_i32 : i32
  }
  func.func @transform_3(%arg0: i32) -> (i32, i32) {
    %c0_i32 = arith.constant 0 : i32
    %c0_i32_0 = arith.constant 0 : i32
    return %arg0, %c0_i32 : i32, i32
  }
}

</mosaic_0001>

<llo_original>
// kernel: next_reward_predictor.1
$region0: #{next_reward_predictor.1}
  #allocation0 [shape = 'u32[]', space=smem, size = 0x4, offset = 0x4, fixed_abs, tag = 'smem constant byte address 0x4 - core index']
  #allocation1 [shape = 'u32[144,128]{1,0:T(1,128)}', space=vmem, size = 0x12000, scoped, tag = 'internal scratch']
  #allocation2 [shape = 'f32[1]{0:T(128)S(6)}', space=smem, size = 0x200, scoped, tag = 'scoped memory for next_reward_predictor.1']
  %s0 = inlined_call_operand.hbm [shape: f32[8,32], index: 0, kind: input, shape index: {}]
  %s1 = inlined_call_operand.vmem [shape: f32[1,32], index: 1, kind: input, shape index: {}]
  %s2 = inlined_call_operand.<no memory space> [shape: f32[1], index: 2, kind: input, shape index: {}]
  %s3 = inlined_call_operand.vmem [shape: f32[8,1], index: 3, kind: output, shape index: {}]
  %s4 = sld [smem:[#allocation0]]
  $region26: #{next_reward_predictor.1} parent=0
    _
  %s6 = ssub.s32 1, %s4
  %s7 = scalar_select 0, %s6, %s4
  %8 = sst [smem:[#allocation2]] %s2
  $region1: #{next_reward_predictor.1} parent=0
    #allocation3 [shape = 'u8[4096]{0}', space=vmem, size = 0x1000, scoped, tag = 'input window, operand 0, single buffered']
    #allocation4 [shape = 's32[1]{0}', space=sflag, size = 0x4, scoped, tag = 'scoped memory for next_reward_predictor.1']
    %9 = vsyncpa [#allocation4], 0
    // Predicated region
    $region2: #{next_reward_predictor.1} parent=1 // pred_check
      _
    $region3: #{next_reward_predictor.1} parent=1 // pred_check_branch
      %11 = sbr.rel (0) target = $region5
    $region4: #{next_reward_predictor.1} parent=1 // pred_region
      %s13 = ssub.s32 128, 128
      %14 = vsyncadd [#allocation4], %s13
      %s16 = sshll.u32 [#allocation3], 4
      %s17 = int_to_ptr.vmem [resolvable:$true] %s16
      %19 = dma.hbm_to_vmem [thread:$0]  %s0, 128, %s17, [#allocation4]
    $region5: #{next_reward_predictor.1} parent=1 // pred_fallthru
      _
    // Predicated region
    $region6: #{next_reward_predictor.1} parent=1 // pred_check
      _
    $region7: #{next_reward_predictor.1} parent=1 // pred_check_branch
      %21 = sbr.rel (0) target = $region9
    $region8: #{next_reward_predictor.1} parent=1 // pred_region
      _
    $region9: #{next_reward_predictor.1} parent=1 // pred_fallthru
      _
    // Predicated region
    $region10: #{next_reward_predictor.1} parent=1 // pred_check
      _
    $region11: #{next_reward_predictor.1} parent=1 // pred_check_branch
      %23 = sbr.rel (0) target = $region13
    $region12: #{next_reward_predictor.1} parent=1 // pred_region
      _
    $region13: #{next_reward_predictor.1} parent=1 // pred_fallthru
      _
    // Predicated region
    $region14: #{next_reward_predictor.1} parent=1 // pred_check
      _
    $region15: #{next_reward_predictor.1} parent=1 // pred_check_branch
      %25 = sbr.rel (0) target = $region17
    $region16: #{next_reward_predictor.1} parent=1 // pred_region
      %26 = dma.done [#allocation4], 128
    $region17: #{next_reward_predictor.1} parent=1 // pred_fallthru
      _
    %v27 = vld [vmem:[#allocation3] sm:$0xff]
    %v28 = vld [vmem:[%s1] sm:$0x1]
    %v30 = vlaneseq
    %v31 = vshrl.u32 %v30, 7
    %v32 = vsub.s32 0, %v31
    %v33 = vrot.slane %v28, %v32
    %v35 = vmul.f32 %v27, %v33
    %vm36 = vcmask 261120
    %v37 = vsel %vm36, %v35, 0.0
    %38 = vadd.xlane.f32.xlu0 %v37
    %v39 = vpop.xlane.xlu0 %38
    %s40 = sld [smem:[#allocation2]]
    %v41 = vstv %s40
    %v42 = vadd.f32 %v39, %v41
    %v43 = vtanh.pop %v42
    %vm44 = vcmask 7168
    %45 = vst.msk [vmem:[%s3] sm:$0xff] %vm44, %v43
    // Predicated region
    $region18: #{next_reward_predictor.1} parent=1 // pred_check
      _
    $region19: #{next_reward_predictor.1} parent=1 // pred_check_branch
      %47 = sbr.rel (0) target = $region21
    $region20: #{next_reward_predictor.1} parent=1 // pred_region
      _
    $region21: #{next_reward_predictor.1} parent=1 // pred_fallthru
      _
    // Predicated region
    $region22: #{next_reward_predictor.1} parent=1 // pred_check
      _
    $region23: #{next_reward_predictor.1} parent=1 // pred_check_branch
      %49 = sbr.rel (0) target = $region25
    $region24: #{next_reward_predictor.1} parent=1 // pred_region
      _
    $region25: #{next_reward_predictor.1} parent=1 // pred_fallthru
      _
    %50 = vsyncpa [#allocation4], 1

</llo_original>
